<compile_context>
chip_gen: v6e
topology: v6e:2x2x1
jax: 0.10.0
libtpu: 0.0.40
codegen_flags: <defaults>
</compile_context>

<pallas_src>
import jax
import jax.numpy as jnp
import numpy as np
from jax.experimental import pallas as pl
from jax.experimental.pallas import tpu as pltpu


def _state_step_kernel(tau_ref, x_ref, h_ref, o_ref):
    """Elementwise state update: o = h + tau * (x - h)."""
    tau = tau_ref[0, 0]          # scalar from SMEM
    x = x_ref[...]               # (block_m, LANE) tile
    h = h_ref[...]               # (block_m, LANE) tile (same shape as x)
    o_ref[...] = h + tau * (x - h)


_LANE = 1024  # 8 vregs wide per row; keeps loads/stores lane-dense & unmasked


def state_gradient_step(x, h, tau, *, lane=_LANE,
                        target_block_bytes=2 << 20, min_grid_steps=4):
    """z = h + tau * (x - h), elementwise, with x.shape == h.shape.

    Flattens the problem to a (rows, lane) view so batch does not waste
    sublanes, then tiles rows with large blocks.
    """
    assert x.shape == h.shape, (x.shape, h.shape)
    orig_shape = x.shape
    total = int(np.prod(orig_shape))

    # Flatten to a dense (rows, lane) view; pad (rarely needed) to a multiple
    # of `lane` so the 2-D view exists. Padding tail values are ignored.
    pad = (-total) % lane
    xf = x.reshape(-1)
    hf = h.reshape(-1)
    if pad:
        xf = jnp.pad(xf, (0, pad))
        hf = jnp.pad(hf, (0, pad))
    rows = (total + pad) // lane
    xf = xf.reshape(rows, lane)
    hf = hf.reshape(rows, lane)

    elem = xf.dtype.itemsize
    # Largest row-block (multiple of 8) under the per-array VMEM target.
    max_bm = max(8, (target_block_bytes // (lane * elem)) // 8 * 8)
    if rows <= max_bm:
        block_m = rows                      # small problem: single block
    else:
        # Keep at least `min_grid_steps` steps so both v7x TCs get work.
        block_m = min(max_bm, pl.cdiv(rows, min_grid_steps))
        block_m = max(8, (block_m // 8) * 8)
    grid = (pl.cdiv(rows, block_m),)

    tau_arr = jnp.asarray(tau, jnp.float32).reshape(1, 1)

    out = pl.pallas_call(
        _state_step_kernel,
        out_shape=jax.ShapeDtypeStruct((rows, lane), xf.dtype),
        grid_spec=pltpu.PrefetchScalarGridSpec(
            num_scalar_prefetch=0,
            grid=grid,
            in_specs=[
                pl.BlockSpec(memory_space=pltpu.MemorySpace.SMEM),   # tau (1,1)
                pl.BlockSpec((block_m, lane), lambda i: (i, 0)),     # x
                pl.BlockSpec((block_m, lane), lambda i: (i, 0)),     # h
            ],
            out_specs=pl.BlockSpec((block_m, lane), lambda i: (i, 0)),
        ),
        compiler_params=pltpu.CompilerParams(
            dimension_semantics=("parallel",),
            vmem_limit_bytes=32 * 1024 * 1024,
        ),
    )(tau_arr, xf, hf)

    out = out.reshape(-1)
    if pad:
        out = out[:total]
    return out.reshape(orig_shape)


class StateGradientJAX:
    """JAX/Pallas equivalent of the PyTorch StateGradient module (forward only)."""

    def __init__(self, filters, shape, tau=0.1):
        shape = (filters,) + tuple(shape)
        self.flattened_shape = int(np.prod(shape))
        self.filters = filters
        self.h0 = jnp.zeros((1, self.flattened_shape), jnp.float32)
        self.tau = jnp.asarray(tau, jnp.float32)
        self.state = jnp.zeros((1, self.flattened_shape), jnp.float32)
        # Replaces torch.is_nonzero(state.abs().sum()): no device->host sync.
        # Numerically identical because h0 == zeros, so an all-zero state and
        # h0 produce the same update.
        self._initialized = False

    def __call__(self, x):
        orig_shape = x.shape
        B = x.shape[0]
        x_flat = x.reshape((B, -1)).astype(jnp.float32)
        N = x_flat.shape[1]
        h = self.state if self._initialized else self.h0
        # Broadcast (1, N) h0 / keep (B, N) state: matches torch broadcasting,
        # and gives every batch row its own state on subsequent calls.
        h_flat = jnp.broadcast_to(h, (B, N))
        z = state_gradient_step(x_flat, h_flat, self.tau)
        self.state = z              # (B, N), same as torch after first call
        self._initialized = True
        return z.reshape(orig_shape)


if __name__ == "__main__":
    # Small NCHW input: batch=2, channels=4, spatial=16x16 -> N = 4*16*16 = 1024
    key = jax.random.PRNGKey(0)
    B, C, H, W = 2, 4, 16, 16
    x = jax.random.normal(key, (B, C, H, W), dtype=jnp.float32)

    layer = StateGradientJAX(filters=C, shape=(H, W), tau=0.1)
    z = layer(x)
    z = jax.block_until_ready(z)

    tau32 = np.float32(0.1)

    # First call with zero state -> z = tau * x
    ref = tau32 * np.asarray(x)
    np.testing.assert_allclose(np.asarray(z), ref, rtol=1e-6, atol=1e-6)

    # Second call uses the stored (B, N) state per batch row:
    #   z2 = state + tau * (x - state)
    z2 = jax.block_until_ready(layer(x))
    z_np = np.asarray(z).reshape(B, -1)
    x_np = np.asarray(x).reshape(B, -1)
    ref2 = z_np + tau32 * (x_np - z_np)
    np.testing.assert_allclose(np.asarray(z2).reshape(B, -1), ref2,
                               rtol=1e-6, atol=1e-6)

    assert z.shape == x.shape and z.dtype == jnp.float32
    assert z2.shape == x.shape and z2.dtype == jnp.float32
    print("KERNEL_OK")
</pallas_src>

<mosaic_0001>
module attributes {stable_mosaic.version = 11 : i64} {
  func.func @_state_step_kernel(%arg0: i32, %arg1: memref<1x1xf32, #tpu.memory_space<smem>>, %arg2: memref<2x1024xf32, #tpu.memory_space<vmem>>, %arg3: memref<2x1024xf32, #tpu.memory_space<vmem>>, %arg4: memref<2x1024xf32, #tpu.memory_space<vmem>>) attributes {dimension_semantics = [#tpu.dimension_semantics<parallel>], iteration_bounds = array<i64: 1>, scalar_prefetch = 0 : i64, scratch_operands = 0 : i64, tpu.core_type = #tpu.core_type<tc>, window_params = [{transform_indices = @transform_0, window_bounds = array<i64: 1, 1>}, {transform_indices = @transform_1, window_bounds = array<i64: 2, 1024>}, {transform_indices = @transform_2, window_bounds = array<i64: 2, 1024>}, {transform_indices = @transform_3, window_bounds = array<i64: 2, 1024>}]} {
    %c0 = arith.constant 0 : index
    %c0_0 = arith.constant 0 : index
    %0 = memref.load %arg1[%c0, %c0_0] : memref<1x1xf32, #tpu.memory_space<smem>>
    %c0_1 = arith.constant 0 : index
    %c0_2 = arith.constant 0 : index
    %1 = vector.load %arg2[%c0_1, %c0_2] : memref<2x1024xf32, #tpu.memory_space<vmem>>, vector<2x1024xf32>
    %c0_3 = arith.constant 0 : index
    %c0_4 = arith.constant 0 : index
    %2 = vector.load %arg3[%c0_3, %c0_4] : memref<2x1024xf32, #tpu.memory_space<vmem>>, vector<2x1024xf32>
    %3 = arith.subf %1, %2 : vector<2x1024xf32>
    %4 = vector.broadcast %0 : f32 to vector<2x1024xf32>
    %5 = arith.mulf %4, %3 : vector<2x1024xf32>
    %6 = arith.addf %2, %5 : vector<2x1024xf32>
    %c0_5 = arith.constant 0 : index
    %c0_6 = arith.constant 0 : index
    %7 = vector.load %arg4[%c0_5, %c0_6] : memref<2x1024xf32, #tpu.memory_space<vmem>>, vector<2x1024xf32>
    tpu.vector_store %arg4[%c0_5, %c0_6], %6 {strides = array<i32>} : memref<2x1024xf32, #tpu.memory_space<vmem>>, vector<2x1024xf32>,
    return
  }
  func.func @transform_0(%arg0: i32) -> (i32, i32) {
    %c0_i32 = arith.constant 0 : i32
    %c0_i32_0 = arith.constant 0 : i32
    %c0_i32_1 = arith.constant 0 : i32
    return %c0_i32, %c0_i32_0 : i32, i32
  }
  func.func @transform_1(%arg0: i32) -> (i32, i32) {
    %c0_i32 = arith.constant 0 : i32
    %c0_i32_0 = arith.constant 0 : i32
    return %arg0, %c0_i32 : i32, i32
  }
  func.func @transform_2(%arg0: i32) -> (i32, i32) {
    %c0_i32 = arith.constant 0 : i32
    %c0_i32_0 = arith.constant 0 : i32
    return %arg0, %c0_i32 : i32, i32
  }
  func.func @transform_3(%arg0: i32) -> (i32, i32) {
    %c0_i32 = arith.constant 0 : i32
    %c0_i32_0 = arith.constant 0 : i32
    return %arg0, %c0_i32 : i32, i32
  }
}

</mosaic_0001>

<llo_original>
// kernel: tpu_custom_call.1
$region0: #{tpu_custom_call.1}
  #allocation0 [shape = 'u32[]', space=smem, size = 0x4, offset = 0x4, fixed_abs, tag = 'smem constant byte address 0x4 - core index']
  #allocation1 [shape = 'u32[144,128]{1,0:T(1,128)}', space=vmem, size = 0x12000, scoped, tag = 'internal scratch']
  #allocation2 [shape = 'f32[1,1]{1,0:T(1,128)S(6)}', space=smem, size = 0x200, scoped, tag = 'scoped memory for tpu_custom_call.1']
  %s0 = inlined_call_operand.<no memory space> [shape: f32[1,1], index: 0, kind: input, shape index: {}]
  %s1 = inlined_call_operand.hbm [shape: f32[2,1024], index: 1, kind: input, shape index: {}]
  %s2 = inlined_call_operand.hbm [shape: f32[2,1024], index: 2, kind: input, shape index: {}]
  %s3 = inlined_call_operand.hbm [shape: f32[2,1024], index: 3, kind: output, shape index: {}]
  %s4 = sld [smem:[#allocation0]]
  $region30: #{tpu_custom_call.1} parent=0
    _
  %s6 = ssub.s32 1, %s4
  %s7 = scalar_select 0, %s6, %s4
  %8 = sst [smem:[#allocation2]] %s0
  $region1: #{tpu_custom_call.1} parent=0
    #allocation3 [shape = 'u8[8192]{0}', space=vmem, size = 0x2000, scoped, tag = 'input window, operand 1, single buffered']
    #allocation4 [shape = 's32[1]{0}', space=sflag, size = 0x4, scoped, tag = 'scoped memory for tpu_custom_call.1']
    #allocation5 [shape = 's32[1]{0}', space=sflag, size = 0x4, scoped, tag = 'scoped memory for tpu_custom_call.1']
    #allocation6 [shape = 'u8[8192]{0}', space=vmem, size = 0x2000, scoped, tag = 'input window, operand 2, single buffered']
    #allocation7 [shape = 's32[1]{0}', space=sflag, size = 0x4, scoped, tag = 'scoped memory for tpu_custom_call.1']
    #allocation8 [shape = 'u8[8192]{0}', space=vmem, size = 0x2000, scoped, tag = 'output window, operand 0, single buffered']
    %9 = vsyncpa [#allocation4], 0
    %10 = vsyncpa [#allocation7], 0
    %11 = vsyncpa [#allocation5], 0
    // Predicated region
    $region2: #{tpu_custom_call.1} parent=1 // pred_check
      _
    $region3: #{tpu_custom_call.1} parent=1 // pred_check_branch
      %13 = sbr.rel (0) target = $region5
    $region4: #{tpu_custom_call.1} parent=1 // pred_region
      _
    $region5: #{tpu_custom_call.1} parent=1 // pred_fallthru
      _
    // Predicated region
    $region6: #{tpu_custom_call.1} parent=1 // pred_check
      _
    $region7: #{tpu_custom_call.1} parent=1 // pred_check_branch
      %15 = sbr.rel (0) target = $region9
    $region8: #{tpu_custom_call.1} parent=1 // pred_region
      %s17 = ssub.s32 256, 256
      %18 = vsyncadd [#allocation4], %s17
      %s20 = sshll.u32 [#allocation3], 4
      %s21 = int_to_ptr.vmem [resolvable:$true] %s20
      %23 = dma.hbm_to_vmem [thread:$0]  %s1, 256, %s21, [#allocation4]
    $region9: #{tpu_custom_call.1} parent=1 // pred_fallthru
      _
    // Predicated region
    $region10: #{tpu_custom_call.1} parent=1 // pred_check
      _
    $region11: #{tpu_custom_call.1} parent=1 // pred_check_branch
      %25 = sbr.rel (0) target = $region13
    $region12: #{tpu_custom_call.1} parent=1 // pred_region
      %s27 = ssub.s32 256, 256
      %28 = vsyncadd [#allocation7], %s27
      %s30 = sshll.u32 [#allocation6], 4
      %s31 = int_to_ptr.vmem [resolvable:$true] %s30
      %33 = dma.hbm_to_vmem [thread:$0]  %s2, 256, %s31, [#allocation7]
    $region13: #{tpu_custom_call.1} parent=1 // pred_fallthru
      _
    // Predicated region
    $region14: #{tpu_custom_call.1} parent=1 // pred_check
      _
    $region15: #{tpu_custom_call.1} parent=1 // pred_check_branch
      %35 = sbr.rel (0) target = $region17
    $region16: #{tpu_custom_call.1} parent=1 // pred_region
      %36 = dma.done [#allocation4], 256
    $region17: #{tpu_custom_call.1} parent=1 // pred_fallthru
      _
    // Predicated region
    $region18: #{tpu_custom_call.1} parent=1 // pred_check
      _
    $region19: #{tpu_custom_call.1} parent=1 // pred_check_branch
      %38 = sbr.rel (0) target = $region21
    $region20: #{tpu_custom_call.1} parent=1 // pred_region
      %39 = dma.done [#allocation7], 256
    $region21: #{tpu_custom_call.1} parent=1 // pred_fallthru
      _
    %s40 = sld [smem:[#allocation2]]
    %v41 = vld [vmem:[#allocation3] sm:$0xff]
    %v42 = vld [vmem:[#allocation3 + $0x8] sm:$0xff]
    %v43 = vld [vmem:[#allocation6] sm:$0xff]
    %v44 = vld [vmem:[#allocation6 + $0x8] sm:$0xff]
    %v45 = vsub.f32 %v41, %v43
    %v46 = vsub.f32 %v42, %v44
    %v47 = vstv %s40
    %v48 = vmul.f32 %v47, %v45
    %v49 = vmul.f32 %v47, %v46
    %v50 = vadd.f32 %v43, %v48
    %v51 = vadd.f32 %v44, %v49
    %52 = vst [vmem:[#allocation8] sm:$0xff] %v50
    %53 = vst [vmem:[#allocation8 + $0x8] sm:$0xff] %v51
    // Predicated region
    $region22: #{tpu_custom_call.1} parent=1 // pred_check
      _
    $region23: #{tpu_custom_call.1} parent=1 // pred_check_branch
      %55 = sbr.rel (0) target = $region25
    $region24: #{tpu_custom_call.1} parent=1 // pred_region
      %s57 = ssub.s32 256, 256
      %58 = vsyncadd [#allocation5], %s57
      %s60 = sshll.u32 [#allocation8], 4
      %s61 = int_to_ptr.vmem [resolvable:$true] %s60
      %63 = dma.vmem_to_hbm [thread:$0]  %s61, 256, %s3, [#allocation5]
    $region25: #{tpu_custom_call.1} parent=1 // pred_fallthru
      _
    // Predicated region
    $region26: #{tpu_custom_call.1} parent=1 // pred_check
      _
    $region27: #{tpu_custom_call.1} parent=1 // pred_check_branch
      %65 = sbr.rel (0) target = $region29
    $region28: #{tpu_custom_call.1} parent=1 // pred_region
      %66 = dma.done [#allocation5], 256
    $region29: #{tpu_custom_call.1} parent=1 // pred_fallthru
      _
    %67 = vsyncpa [#allocation4], 1
    %68 = vsyncpa [#allocation7], 1
    %69 = vsyncpa [#allocation5], 1

</llo_original>
